<compile_context>
chip_gen: v7x
topology: tpu7x:2x2x1
jax: 0.10.0
libtpu: 0.0.40
codegen_flags: <defaults>
</compile_context>

<pallas_src>
import functools

import jax
import jax.numpy as jnp
from jax import lax
from jax.experimental import pallas as pl
from jax.experimental.pallas import tpu as pltpu

_EPS = 1e-8


def _cdiv(a: int, b: int) -> int:
    return -(-a // b)


def _round_up(a: int, b: int) -> int:
    return _cdiv(a, b) * b


def _tpu_flavor() -> str:
    """Best-effort TPU generation detection for tile / VMEM budgeting."""
    try:
        kind = jax.devices()[0].device_kind.lower()
    except Exception:
        return "unknown"
    if "v7" in kind or "7x" in kind:
        return "v7x"
    if "v6" in kind:
        return "v6"
    if "v5" in kind:
        return "v5"
    return "unknown"


# ------------------------- fused (x fits in VMEM) ---------------------------
def _fused_kernel(inv_cnt_ref, acc_prev_ref, acc2_prev_ref, x_ref,
                  out_ref, nacc_ref, nacc2_ref, mean_ref, std_ref,
                  *, fold, feat):
    """One-shot kernel: stats + mean/std + normalize on a VMEM-resident x."""
    xt = x_ref[...].astype(jnp.float32)                  # (n_f, width)
    s = jnp.sum(xt, axis=0, keepdims=True)               # (1, width) lane sums
    s2 = jnp.sum(xt * xt, axis=0, keepdims=True)

    # Reduce across the `fold` lane groups with a log-tree of circular lane
    # rotations (XLU, essentially free).  Afterwards every lane j holds the
    # per-feature total for feature (j % feat), replicated across the fold
    # groups -> no in-kernel reshape, and mean/inv_std are already laid out
    # exactly like x's folded lanes.
    shift = feat * (fold // 2)
    while shift >= feat:
        s = s + pltpu.roll(s, shift, axis=1)
        s2 = s2 + pltpu.roll(s2, shift, axis=1)
        shift //= 2

    inv_cnt = inv_cnt_ref[0, 0]                          # scalar from SMEM
    nacc = acc_prev_ref[...] + s
    nacc2 = acc2_prev_ref[...] + s2
    mean = nacc * inv_cnt
    var = nacc2 * inv_cnt - mean * mean
    std = jnp.sqrt(jnp.maximum(var, 0.0))                # clamp FP cancellation
    inv_std = 1.0 / (std + _EPS)

    nacc_ref[...] = nacc
    nacc2_ref[...] = nacc2
    mean_ref[...] = mean
    std_ref[...] = std
    out_ref[...] = ((xt - mean) * inv_std).astype(out_ref.dtype)


# --------------------- pass 1 (tiled): column statistics --------------------
def _stats_kernel(x_ref, acc_ref, acc2_ref, *, n_f, tile, mask_tail):
    i = pl.program_id(0)

    @pl.when(i == 0)
    def _():
        acc_ref[...] = jnp.zeros_like(acc_ref)
        acc2_ref[...] = jnp.zeros_like(acc2_ref)

    xt = x_ref[...].astype(jnp.float32)
    if mask_tail:
        # The last block may hang over the end of the (unpadded) array; its
        # out-of-range rows have unspecified contents -> zero them first.
        valid = n_f - i * tile
        rows = lax.broadcasted_iota(jnp.int32, xt.shape, 0)
        xt = jnp.where(rows < valid, xt, 0.0)
    acc_ref[...] += jnp.sum(xt, axis=0, keepdims=True)
    acc2_ref[...] += jnp.sum(xt * xt, axis=0, keepdims=True)


# ------------------------ pass 2 (tiled): normalize --------------------------
def _norm_kernel(mean_ref, inv_std_ref, x_ref, o_ref):
    # Out-of-range rows of the last block are dropped by the block writeback.
    o_ref[...] = ((x_ref[...].astype(jnp.float32) - mean_ref[...])
                  * inv_std_ref[...]).astype(o_ref.dtype)


# --------------------------------- wrapper ----------------------------------
@functools.partial(
    jax.jit,
    static_argnames=("row_tile", "fused_max_bytes", "fused_vmem_limit",
                     "alias_pass2"))
def _normalizer_forward_impl(x, accumulation, accumulation_squared, count, *,
                             row_tile, fused_max_bytes, fused_vmem_limit,
                             alias_pass2):
    original_shape = x.shape
    feat = original_shape[-1]
    x2d = x.reshape(-1, feat)
    n_rows = x2d.shape[0]

    # ---- lane folding: pack `fold` consecutive rows into the 128-lane dim so
    # every vld/vst is lane-dense.  fold is chosen to divide n_rows so the
    # fold reshape is a free (metadata-only) view -> x is never copied/padded.
    if 0 < feat <= 128 and 128 % feat == 0 and n_rows > 0:
        base_fold = 128 // feat                        # power of two
        fold = max(1, min(base_fold, n_rows & -n_rows))
    else:
        # TODO(synk): pad the feature dim up to a 128-lane multiple for odd
        # feature widths (< 128 and not a divisor) to avoid masked stores.
        fold = 1
    width = fold * feat
    n_f = max(n_rows // fold, 1)
    x_fold = x2d.reshape(n_f, width)                   # zero-copy view

    # ---- tiny running-count / previous-buffer math (plain JAX, done once).
    # Note: count is fp32 and drifts for very long accumulation — matches the
    # PyTorch reference semantics.
    count = jnp.asarray(count, jnp.float32)
    new_count = count + jnp.float32(n_rows)
    inv_cnt = 1.0 / (new_count + _EPS)
    acc_prev = accumulation[:feat].astype(jnp.float32)
    acc2_prev = accumulation_squared[:feat].astype(jnp.float32)

    # ---------------------------- fused fast path ---------------------------
    x_f32_bytes = x2d.size * 4
    use_fused = (x_f32_bytes <= fused_max_bytes) and (fold == 1 or width == 128)

    if use_fused:
        acc_prev_fold = jnp.tile(acc_prev, fold).reshape(1, width)
        acc2_prev_fold = jnp.tile(acc2_prev, fold).reshape(1, width)
        inv_cnt_arr = jnp.reshape(inv_cnt, (1, 1)).astype(jnp.float32)

        if fused_vmem_limit is not None:
            cparams = pltpu.CompilerParams(vmem_limit_bytes=fused_vmem_limit)
        else:
            cparams = pltpu.CompilerParams()

        out_fold, nacc_f, nacc2_f, mean_f, std_f = pl.pallas_call(
            functools.partial(_fused_kernel, fold=fold, feat=feat),
            out_shape=(jax.ShapeDtypeStruct((n_f, width), x.dtype),
                       jax.ShapeDtypeStruct((1, width), jnp.float32),
                       jax.ShapeDtypeStruct((1, width), jnp.float32),
                       jax.ShapeDtypeStruct((1, width), jnp.float32),
                       jax.ShapeDtypeStruct((1, width), jnp.float32)),
            in_specs=[
                pl.BlockSpec(memory_space=pltpu.MemorySpace.SMEM),  # inv_cnt
                pl.BlockSpec(memory_space=pltpu.MemorySpace.VMEM),  # acc_prev
                pl.BlockSpec(memory_space=pltpu.MemorySpace.VMEM),  # acc2_prev
                pl.BlockSpec(memory_space=pltpu.MemorySpace.VMEM),  # x
            ],
            out_specs=(pl.BlockSpec(memory_space=pltpu.MemorySpace.VMEM),) * 5,
            compiler_params=cparams,
        )(inv_cnt_arr, acc_prev_fold, acc2_prev_fold, x_fold)

        new_acc = nacc_f[0, :feat]
        new_acc2 = nacc2_f[0, :feat]
        mean = mean_f[0, :feat]
        std = std_f[0, :feat]
        out = out_fold.reshape(original_shape)
        return out, new_acc, new_acc2, new_count, mean, std

    # ----------------- large-x path: two streaming passes -------------------
    # Even split of the folded rows across grid steps (no huge pad-to-tile).
    n_tiles = max(1, _cdiv(n_f, row_tile))
    tile = min(_round_up(_cdiv(n_f, n_tiles), 8), _round_up(n_f, 8))
    grid = (_cdiv(n_f, tile),)
    mask_tail = (n_f % tile) != 0

    # pass 1: per-lane sums / sums-of-squares (reduction over row tiles).
    acc_fold, acc2_fold = pl.pallas_call(
        functools.partial(_stats_kernel, n_f=n_f, tile=tile,
                          mask_tail=mask_tail),
        out_shape=(jax.ShapeDtypeStruct((1, width), jnp.float32),
                   jax.ShapeDtypeStruct((1, width), jnp.float32)),
        grid_spec=pltpu.PrefetchScalarGridSpec(
            num_scalar_prefetch=0,
            grid=grid,
            in_specs=[pl.BlockSpec((tile, width), lambda i: (i, 0))],
            out_specs=[pl.BlockSpec((1, width), lambda i: (0, 0)),
                       pl.BlockSpec((1, width), lambda i: (0, 0))],
        ),
        compiler_params=pltpu.CompilerParams(
            dimension_semantics=("arbitrary",)),
    )(x_fold)

    # tiny (feat,)-sized stat math, hoisted out of the per-tile body.
    col_sum = acc_fold.reshape(fold, feat).sum(axis=0)
    col_sq = acc2_fold.reshape(fold, feat).sum(axis=0)

    new_acc = acc_prev + col_sum
    new_acc2 = acc2_prev + col_sq
    mean = new_acc * inv_cnt
    var = new_acc2 * inv_cnt - mean * mean
    std = jnp.sqrt(jnp.maximum(var, 0.0))
    inv_std = 1.0 / (std + _EPS)

    mean_fold = jnp.tile(mean, fold).reshape(1, width)
    inv_std_fold = jnp.tile(inv_std, fold).reshape(1, width)

    extra = {}
    if alias_pass2:
        # In-place normalize: only enable when x is an intermediate activation
        # (for a non-donated jit parameter XLA inserts a defensive copy).
        extra["input_output_aliases"] = {2: 0}

    # pass 2: elementwise normalization (independent tiles).
    # TODO(synk): use CORE_PARALLEL on a leading core axis to split this pass
    # across the two TensorCores on v7x.
    out_fold = pl.pallas_call(
        _norm_kernel,
        out_shape=jax.ShapeDtypeStruct((n_f, width), x.dtype),
        grid_spec=pltpu.PrefetchScalarGridSpec(
            num_scalar_prefetch=0,
            grid=grid,
            in_specs=[
                pl.BlockSpec((1, width), lambda i: (0, 0)),
                pl.BlockSpec((1, width), lambda i: (0, 0)),
                pl.BlockSpec((tile, width), lambda i: (i, 0)),
            ],
            out_specs=pl.BlockSpec((tile, width), lambda i: (i, 0)),
        ),
        compiler_params=pltpu.CompilerParams(
            dimension_semantics=("parallel",)),
        **extra,
    )(mean_fold, inv_std_fold, x_fold)

    out = out_fold.reshape(original_shape)
    return out, new_acc, new_acc2, new_count, mean, std


def normalizer_forward(x, accumulation, accumulation_squared, count, *,
                       row_tile=None, alias_pass2=False):
    """Functional Normalizer.forward (training path, count < max_accumulation).

    Returns (out, new_accumulation, new_accumulation_squared, new_count,
             mean, std).
    """
    flavor = _tpu_flavor()
    if row_tile is None:
        # v7x: higher HBM bandwidth -> larger blocks to amortize per-step
        # overhead; still only ~4 MiB of double-buffered VMEM in pass 2,
        # comfortably inside every generation's default scoped VMEM.
        row_tile = 2048 if flavor == "v7x" else 1024
    if flavor == "v7x":                      # 64 MiB physical VMEM
        fused_max_bytes, fused_vmem_limit = 8 << 20, 56 << 20
    elif flavor in ("v5", "v6"):             # 128 MiB physical VMEM
        fused_max_bytes, fused_vmem_limit = 16 << 20, 100 << 20
    else:                                    # unknown: stay under defaults
        fused_max_bytes, fused_vmem_limit = 3 << 20, None
    return _normalizer_forward_impl(
        x, accumulation, accumulation_squared, count,
        row_tile=row_tile, fused_max_bytes=fused_max_bytes,
        fused_vmem_limit=fused_vmem_limit, alias_pass2=alias_pass2)


# ------------------------------ pure-JAX reference ---------------------------
def _reference(x, acc, acc2, count):
    shape = x.shape
    feat = shape[-1]
    x2d = x.reshape(-1, feat).astype(jnp.float32)
    new_count = count + x2d.shape[0]
    new_acc = acc + jnp.sum(x2d, axis=0)
    new_acc2 = acc2 + jnp.sum(x2d ** 2, axis=0)
    mean = new_acc / (new_count + 1e-8)
    std = jnp.sqrt(new_acc2 / (new_count + 1e-8) - mean ** 2)
    out = (x2d - mean) / (std + 1e-8)
    return out.reshape(shape), new_acc, new_acc2, new_count, mean, std


if __name__ == "__main__":
    # ---- test 1: module-sized input (exercises the fused VMEM-resident path)
    key = jax.random.PRNGKey(0)
    x = jax.random.normal(key, (2, 4, 16, 16), dtype=jnp.float32) * 2.0 + 0.5

    feat = x.shape[-1]
    accumulation = jnp.zeros((feat,), jnp.float32)
    accumulation_squared = jnp.zeros((feat,), jnp.float32)
    count = jnp.float32(0.0)

    out, new_acc, new_acc2, new_count, mean, std = normalizer_forward(
        x, accumulation, accumulation_squared, count)
    jax.block_until_ready(out)

    ref_out, ref_acc, ref_acc2, ref_count, ref_mean, ref_std = _reference(
        x, accumulation, accumulation_squared, count)

    assert jnp.allclose(out, ref_out, atol=1e-4, rtol=1e-4)
    assert jnp.allclose(new_acc, ref_acc, atol=1e-3, rtol=1e-4)
    assert jnp.allclose(new_acc2, ref_acc2, atol=1e-3, rtol=1e-4)
    assert jnp.allclose(new_count, ref_count)
    assert jnp.allclose(mean, ref_mean, atol=1e-5, rtol=1e-4)
    assert jnp.allclose(std, ref_std, atol=1e-5, rtol=1e-4)

    # ---- test 2: force the tiled two-pass path with a non-divisible tail
    # (covers tail masking + partial last block writeback), still small.
    key2 = jax.random.PRNGKey(1)
    x2 = jax.random.normal(key2, (3, 50, 16), dtype=jnp.float32) * 1.5 - 0.25
    out2, nacc2_, nacc2sq_, ncnt2, mean2, std2 = _normalizer_forward_impl(
        x2, accumulation, accumulation_squared, count,
        row_tile=16, fused_max_bytes=0, fused_vmem_limit=None,
        alias_pass2=False)
    jax.block_until_ready(out2)
    r_out2, r_acc2, r_acc2sq, r_cnt2, r_mean2, r_std2 = _reference(
        x2, accumulation, accumulation_squared, count)
    assert jnp.allclose(out2, r_out2, atol=1e-4, rtol=1e-4)
    assert jnp.allclose(nacc2_, r_acc2, atol=1e-3, rtol=1e-4)
    assert jnp.allclose(nacc2sq_, r_acc2sq, atol=1e-3, rtol=1e-4)
    assert jnp.allclose(ncnt2, r_cnt2)
    assert jnp.allclose(mean2, r_mean2, atol=1e-5, rtol=1e-4)
    assert jnp.allclose(std2, r_std2, atol=1e-5, rtol=1e-4)

    print("KERNEL_OK")
</pallas_src>

<mosaic_0001>
module attributes {stable_mosaic.version = 11 : i64} {
  func.func @_fused_kernel(%arg0: memref<1x1xf32, #tpu.memory_space<smem>>, %arg1: memref<1x128xf32, #tpu.memory_space<vmem>>, %arg2: memref<1x128xf32, #tpu.memory_space<vmem>>, %arg3: memref<16x128xf32, #tpu.memory_space<vmem>>, %arg4: memref<16x128xf32, #tpu.memory_space<vmem>>, %arg5: memref<1x128xf32, #tpu.memory_space<vmem>>, %arg6: memref<1x128xf32, #tpu.memory_space<vmem>>, %arg7: memref<1x128xf32, #tpu.memory_space<vmem>>, %arg8: memref<1x128xf32, #tpu.memory_space<vmem>>) attributes {dimension_semantics = [], scalar_prefetch = 0 : i64, scratch_operands = 0 : i64, tpu.core_type = #tpu.core_type<tc>} {
    %c0 = arith.constant 0 : index
    %c0_0 = arith.constant 0 : index
    %0 = vector.load %arg3[%c0, %c0_0] : memref<16x128xf32, #tpu.memory_space<vmem>>, vector<16x128xf32>
    %cst = arith.constant dense<0.000000e+00> : vector<128xf32>
    %1 = vector.multi_reduction <add>, %0, %cst [0] : vector<16x128xf32> to vector<128xf32>
    %2 = vector.shape_cast %1 : vector<128xf32> to vector<1x128xf32>
    %3 = arith.mulf %0, %0 : vector<16x128xf32>
    %cst_1 = arith.constant dense<0.000000e+00> : vector<128xf32>
    %4 = vector.multi_reduction <add>, %3, %cst_1 [0] : vector<16x128xf32> to vector<128xf32>
    %5 = vector.shape_cast %4 : vector<128xf32> to vector<1x128xf32>
    %c64_i32 = arith.constant 64 : i32
    %6 = tpu.dynamic_rotate %2 by %c64_i32 dim 1 : vector<1x128xf32>, i32 -> vector<1x128xf32>
    %7 = arith.addf %2, %6 : vector<1x128xf32>
    %c64_i32_2 = arith.constant 64 : i32
    %8 = tpu.dynamic_rotate %5 by %c64_i32_2 dim 1 : vector<1x128xf32>, i32 -> vector<1x128xf32>
    %9 = arith.addf %5, %8 : vector<1x128xf32>
    %c32_i32 = arith.constant 32 : i32
    %10 = tpu.dynamic_rotate %7 by %c32_i32 dim 1 : vector<1x128xf32>, i32 -> vector<1x128xf32>
    %11 = arith.addf %7, %10 : vector<1x128xf32>
    %c32_i32_3 = arith.constant 32 : i32
    %12 = tpu.dynamic_rotate %9 by %c32_i32_3 dim 1 : vector<1x128xf32>, i32 -> vector<1x128xf32>
    %13 = arith.addf %9, %12 : vector<1x128xf32>
    %c16_i32 = arith.constant 16 : i32
    %14 = tpu.dynamic_rotate %11 by %c16_i32 dim 1 : vector<1x128xf32>, i32 -> vector<1x128xf32>
    %15 = arith.addf %11, %14 : vector<1x128xf32>
    %c16_i32_4 = arith.constant 16 : i32
    %16 = tpu.dynamic_rotate %13 by %c16_i32_4 dim 1 : vector<1x128xf32>, i32 -> vector<1x128xf32>
    %17 = arith.addf %13, %16 : vector<1x128xf32>
    %c0_5 = arith.constant 0 : index
    %c0_6 = arith.constant 0 : index
    %18 = memref.load %arg0[%c0_5, %c0_6] : memref<1x1xf32, #tpu.memory_space<smem>>
    %c0_7 = arith.constant 0 : index
    %c0_8 = arith.constant 0 : index
    %19 = vector.load %arg1[%c0_7, %c0_8] : memref<1x128xf32, #tpu.memory_space<vmem>>, vector<1x128xf32>
    %20 = arith.addf %19, %15 : vector<1x128xf32>
    %c0_9 = arith.constant 0 : index
    %c0_10 = arith.constant 0 : index
    %21 = vector.load %arg2[%c0_9, %c0_10] : memref<1x128xf32, #tpu.memory_space<vmem>>, vector<1x128xf32>
    %22 = arith.addf %21, %17 : vector<1x128xf32>
    %23 = vector.broadcast %18 : f32 to vector<1x128xf32>
    %24 = arith.mulf %20, %23 : vector<1x128xf32>
    %25 = vector.broadcast %18 : f32 to vector<1x128xf32>
    %26 = arith.mulf %22, %25 : vector<1x128xf32>
    %27 = arith.mulf %24, %24 : vector<1x128xf32>
    %28 = arith.subf %26, %27 : vector<1x128xf32>
    %cst_11 = arith.constant 0.000000e+00 : f32
    %29 = vector.broadcast %cst_11 : f32 to vector<1x128xf32>
    %30 = arith.maximumf %28, %29 : vector<1x128xf32>
    %31 = math.sqrt %30 : vector<1x128xf32>
    %cst_12 = arith.constant 9.99999993E-9 : f32
    %32 = vector.broadcast %cst_12 : f32 to vector<1x128xf32>
    %33 = arith.addf %31, %32 : vector<1x128xf32>
    %cst_13 = arith.constant 1.000000e+00 : f32
    %34 = vector.broadcast %cst_13 : f32 to vector<1x128xf32>
    %35 = arith.divf %34, %33 : vector<1x128xf32>
    %c0_14 = arith.constant 0 : index
    %c0_15 = arith.constant 0 : index
    %36 = vector.load %arg5[%c0_14, %c0_15] : memref<1x128xf32, #tpu.memory_space<vmem>>, vector<1x128xf32>
    tpu.vector_store %arg5[%c0_14, %c0_15], %20 {strides = array<i32>} : memref<1x128xf32, #tpu.memory_space<vmem>>, vector<1x128xf32>,
    %c0_16 = arith.constant 0 : index
    %c0_17 = arith.constant 0 : index
    %37 = vector.load %arg6[%c0_16, %c0_17] : memref<1x128xf32, #tpu.memory_space<vmem>>, vector<1x128xf32>
    tpu.vector_store %arg6[%c0_16, %c0_17], %22 {strides = array<i32>} : memref<1x128xf32, #tpu.memory_space<vmem>>, vector<1x128xf32>,
    %c0_18 = arith.constant 0 : index
    %c0_19 = arith.constant 0 : index
    %38 = vector.load %arg7[%c0_18, %c0_19] : memref<1x128xf32, #tpu.memory_space<vmem>>, vector<1x128xf32>
    tpu.vector_store %arg7[%c0_18, %c0_19], %24 {strides = array<i32>} : memref<1x128xf32, #tpu.memory_space<vmem>>, vector<1x128xf32>,
    %c0_20 = arith.constant 0 : index
    %c0_21 = arith.constant 0 : index
    %39 = vector.load %arg8[%c0_20, %c0_21] : memref<1x128xf32, #tpu.memory_space<vmem>>, vector<1x128xf32>
    tpu.vector_store %arg8[%c0_20, %c0_21], %31 {strides = array<i32>} : memref<1x128xf32, #tpu.memory_space<vmem>>, vector<1x128xf32>,
    %40 = vector.broadcast %24 : vector<1x128xf32> to vector<16x128xf32>
    %41 = arith.subf %0, %40 : vector<16x128xf32>
    %42 = vector.broadcast %35 : vector<1x128xf32> to vector<16x128xf32>
    %43 = arith.mulf %41, %42 : vector<16x128xf32>
    %c0_22 = arith.constant 0 : index
    %c0_23 = arith.constant 0 : index
    %44 = vector.load %arg4[%c0_22, %c0_23] : memref<16x128xf32, #tpu.memory_space<vmem>>, vector<16x128xf32>
    tpu.vector_store %arg4[%c0_22, %c0_23], %43 {strides = array<i32>} : memref<16x128xf32, #tpu.memory_space<vmem>>, vector<16x128xf32>,
    return
  }
}

</mosaic_0001>

<llo_original>
// kernel: tile.14
$region0: #{tile.14}
  %s0 = inlined_call_operand.vmem [shape: f32[8,16], index: 0, kind: input, shape index: {}]
  %s1 = inlined_call_operand.vmem [shape: f32[1,128], index: 1, kind: output, shape index: {}]
  $region1: #{tile.14} parent=0
    #allocation0 [shape = 'u8[4096]{0}', space=vmem, size = 0x1000, scoped, tag = 'scoped mem for output reshape']
    %v2 = vld [vmem:[%s0] sm:$0x1]
    %vm3 = vcmask 130048
    %4 = vst.msk [vmem:[#allocation0] sm:$0x1] %vm3, %v2
    %s5 = scalar_lea.vmem %s0, 7
    %v6 = vld [vmem:[%s5] sm:$0x1]
    %7 = vrot.lane.b32.xlu0 %v6, 112
    %v8 = vpop.permute.xlu0 %7
    %vm9 = vcmask 1048448
    %10 = vst.msk [vmem:[#allocation0] sm:$0x1] %vm9, %v8
    %s11 = scalar_lea.vmem %s0, 6
    %v12 = vld [vmem:[%s11] sm:$0x1]
    %13 = vrot.lane.b32.xlu0 %v12, 96
    %v14 = vpop.permute.xlu0 %13
    %vm15 = vcmask 917248
    %16 = vst.msk [vmem:[#allocation0] sm:$0x1] %vm15, %v14
    %s17 = scalar_lea.vmem %s0, 5
    %v18 = vld [vmem:[%s17] sm:$0x1]
    %19 = vrot.lane.b32.xlu0 %v18, 80
    %v20 = vpop.permute.xlu0 %19
    %vm21 = vcmask 786048
    %22 = vst.msk [vmem:[#allocation0] sm:$0x1] %vm21, %v20
    %s23 = scalar_lea.vmem %s0, 4
    %v24 = vld [vmem:[%s23] sm:$0x1]
    %25 = vrot.lane.b32.xlu0 %v24, 64
    %v26 = vpop.permute.xlu0 %25
    %vm27 = vcmask 654848
    %28 = vst.msk [vmem:[#allocation0] sm:$0x1] %vm27, %v26
    %s29 = scalar_lea.vmem %s0, 3
    %v30 = vld [vmem:[%s29] sm:$0x1]
    %31 = vrot.lane.b32.xlu0 %v30, 48
    %v32 = vpop.permute.xlu0 %31
    %vm33 = vcmask 523648
    %34 = vst.msk [vmem:[#allocation0] sm:$0x1] %vm33, %v32
    %s35 = scalar_lea.vmem %s0, 2
    %v36 = vld [vmem:[%s35] sm:$0x1]
    %37 = vrot.lane.b32.xlu0 %v36, 32
    %v38 = vpop.permute.xlu0 %37
    %vm39 = vcmask 392448
    %40 = vst.msk [vmem:[#allocation0] sm:$0x1] %vm39, %v38
    %s41 = scalar_lea.vmem %s0, 1
    %v42 = vld [vmem:[%s41] sm:$0x1]
    %43 = vrot.lane.b32.xlu0 %v42, 16
    %v44 = vpop.permute.xlu0 %43
    %vm45 = vcmask 261248
    %46 = vst.msk [vmem:[#allocation0] sm:$0x1] %vm45, %v44
    %s48 = sshllo.u32 0, 1
    %v50 = vld [vmem:[#allocation0] sm:%s48]
    %s51 = sshllo.u32 0, 1
    %52 = vst [vmem:[%s1] sm:%s51] %v50

// kernel: tile.13
$region0: #{tile.13}
  #allocation0 [shape = 's32[1]{0}', space=sflag, size = 0x4, scoped, tag = 'scoped memory for tile.13']
  %s0 = inlined_call_operand.vmem [shape: f32[16], index: 0, kind: input, shape index: {}]
  %s1 = inlined_call_operand.vmem [shape: f32[8,16], index: 1, kind: output, shape index: {}]
  // Predicated region
  $region2: #{tile.13} parent=0 // pred_check
    _
  $region3: #{tile.13} parent=0 // pred_check_branch
    %3 = sbr.rel (0) target = $region5
  $region4: #{tile.13} parent=0 // pred_region
    _
  $region5: #{tile.13} parent=0 // pred_fallthru
    _
  %v4 = vld [vmem:[%s0] ss:$0 sm:$0xff]
  %5 = vst [vmem:[%s1] sm:$0xff] %v4

// kernel: _normalizer_forward_impl.1
$region0: #{_normalizer_forward_impl.1}
  #allocation0 [shape = 'u32[]', space=smem, size = 0x4, offset = 0x4, fixed_abs, tag = 'smem constant byte address 0x4 - core index']
  #allocation1 [shape = 'u32[144,128]{1,0:T(1,128)}', space=vmem, size = 0x12000, scoped, tag = 'internal scratch']
  #allocation2 [shape = 'f32[1,1]{1,0:T(1,128)S(6)}', space=smem, size = 0x200, scoped, tag = 'scoped memory for _normalizer_forward_impl.1']
  %s0 = inlined_call_operand.<no memory space> [shape: f32[1,1], index: 0, kind: input, shape index: {}]
  %s1 = inlined_call_operand.vmem [shape: f32[1,128], index: 1, kind: input, shape index: {}]
  %s2 = inlined_call_operand.vmem [shape: f32[1,128], index: 2, kind: input, shape index: {}]
  %s3 = inlined_call_operand.vmem [shape: f32[16,128], index: 3, kind: input, shape index: {}]
  %s4 = inlined_call_operand.vmem [shape: f32[16,128], index: 4, kind: output, shape index: {0}]
  %s5 = inlined_call_operand.vmem [shape: f32[1,128], index: 5, kind: output, shape index: {1}]
  %s6 = inlined_call_operand.vmem [shape: f32[1,128], index: 6, kind: output, shape index: {2}]
  %s7 = inlined_call_operand.vmem [shape: f32[1,128], index: 7, kind: output, shape index: {3}]
  %s8 = inlined_call_operand.vmem [shape: f32[1,128], index: 8, kind: output, shape index: {4}]
  %9 = xla_tuple %s4, %s5, %s6, %s7, %s8
  %s10 = sld [smem:[#allocation0]]
  $region58: #{_normalizer_forward_impl.1} parent=0
    _
  %s12 = ssub.s32 1, %s10
  %s13 = scalar_select 0, %s12, %s10
  %14 = sst [smem:[#allocation2]] %s0
  // Predicated region
  $region2: #{_normalizer_forward_impl.1} parent=0 // pred_check
    _
  $region3: #{_normalizer_forward_impl.1} parent=0 // pred_check_branch
    %16 = sbr.rel (0) target = $region5
  $region4: #{_normalizer_forward_impl.1} parent=0 // pred_region
    _
  $region5: #{_normalizer_forward_impl.1} parent=0 // pred_fallthru
    _
  // Predicated region
  $region6: #{_normalizer_forward_impl.1} parent=0 // pred_check
    _
  $region7: #{_normalizer_forward_impl.1} parent=0 // pred_check_branch
    %18 = sbr.rel (0) target = $region9
  $region8: #{_normalizer_forward_impl.1} parent=0 // pred_region
    _
  $region9: #{_normalizer_forward_impl.1} parent=0 // pred_fallthru
    _
  // Predicated region
  $region10: #{_normalizer_forward_impl.1} parent=0 // pred_check
    _
  $region11: #{_normalizer_forward_impl.1} parent=0 // pred_check_branch
    %20 = sbr.rel (0) target = $region13
  $region12: #{_normalizer_forward_impl.1} parent=0 // pred_region
    _
  $region13: #{_normalizer_forward_impl.1} parent=0 // pred_fallthru
    _
  // Predicated region
  $region14: #{_normalizer_forward_impl.1} parent=0 // pred_check
    _
  $region15: #{_normalizer_forward_impl.1} parent=0 // pred_check_branch
    %22 = sbr.rel (0) target = $region17
  $region16: #{_normalizer_forward_impl.1} parent=0 // pred_region
    _
  $region17: #{_normalizer_forward_impl.1} parent=0 // pred_fallthru
    _
  %v23 = vld [vmem:[%s3] sm:$0xff]
  %v24 = vld [vmem:[%s3 + $0x8] sm:$0xff]
  %v25 = vadd.f32 %v23, %v24
  %v26 = vrot.slane %v25, 4
  %v27 = vadd.f32 %v25, %v26
  %v28 = vrot.slane %v27, 2
  %v29 = vadd.f32 %v27, %v28
  %v30 = vrot.slane %v29, 1
  %v31 = vadd.f32 %v29, %v30
  %v32 = vmul.f32 %v23, %v23
  %v33 = vmul.f32 %v24, %v24
  %v34 = vadd.f32 %v32, %v33
  %v35 = vrot.slane %v34, 4
  %v36 = vadd.f32 %v34, %v35
  %v37 = vrot.slane %v36, 2
  %v38 = vadd.f32 %v36, %v37
  %v39 = vrot.slane %v38, 1
  %v40 = vadd.f32 %v38, %v39
  %41 = vrot.lane.b32.xlu0 %v31, 64
  %v42 = vpop.permute.xlu0 %41
  %v43 = vadd.f32 %v31, %v42
  %44 = vrot.lane.b32.xlu0 %v40, 64
  %v45 = vpop.permute.xlu0 %44
  %v46 = vadd.f32 %v40, %v45
  %47 = vrot.lane.b32.xlu0 %v43, 32
  %v48 = vpop.permute.xlu0 %47
  %v49 = vadd.f32 %v43, %v48
  %50 = vrot.lane.b32.xlu0 %v46, 32
  %v51 = vpop.permute.xlu0 %50
  %v52 = vadd.f32 %v46, %v51
  %53 = vrot.lane.b32.xlu0 %v49, 16
  %v54 = vpop.permute.xlu0 %53
  %v55 = vadd.f32 %v49, %v54
  %56 = vrot.lane.b32.xlu0 %v52, 16
  %v57 = vpop.permute.xlu0 %56
  %v58 = vadd.f32 %v52, %v57
  %s59 = sld [smem:[#allocation2]]
  %v60 = vld [vmem:[%s1] sm:$0x1]
  %v61 = vadd.f32 %v60, %v55
  %v62 = vld [vmem:[%s2] sm:$0x1]
  %v63 = vadd.f32 %v62, %v58
  %v64 = vstv %s59
  %v65 = vmul.f32 %v61, %v64
  %v66 = vmul.f32 %v63, %v64
  %v67 = vmul.f32 %v65, %v65
  %v68 = vsub.f32 %v66, %v67
  %v69 = vmax.f32 %v68, 0.0
  %v70 = vrsqrt.pop %v69
  %v71 = vmul.f32 %v69, %v70
  %vm72 = vcmp.eq.f32.partialorder %v69, inf
  %v73 = vsel %vm72, %v69, %v71
  %vm74 = vcmp.eq.f32.partialorder %v69, 0.0
  %v75 = vand.u32 %v69, 2147483648
  %v76 = vsel %vm74, %v75, %v73
  %v77 = vadd.f32 %v76, 1e-08
  %v78 = vrcp.pop %v77
  %v79 = vmul.f32 1.0, %v78
  %80 = vst [vmem:[%s5] sm:$0x1] %v61
  %81 = vst [vmem:[%s6] sm:$0x1] %v63
  %82 = vst [vmem:[%s7] sm:$0x1] %v65
  %83 = vst [vmem:[%s8] sm:$0x1] %v76
  %v85 = vlaneseq
  %v86 = vshrl.u32 %v85, 7
  %v87 = vsub.s32 0, %v86
  %v88 = vrot.slane %v65, %v87
  %v90 = vsub.f32 %v23, %v88
  %v91 = vsub.f32 %v24, %v88
  %v93 = vlaneseq
  %v94 = vshrl.u32 %v93, 7
  %v95 = vsub.s32 0, %v94
  %v96 = vrot.slane %v79, %v95
  %v98 = vmul.f32 %v90, %v96
  %v99 = vmul.f32 %v91, %v96
  %100 = vst [vmem:[%s4] sm:$0xff] %v98
  %101 = vst [vmem:[%s4 + $0x8] sm:$0xff] %v99
  // Predicated region
  $region18: #{_normalizer_forward_impl.1} parent=0 // pred_check
    _
  $region19: #{_normalizer_forward_impl.1} parent=0 // pred_check_branch
    %103 = sbr.rel (0) target = $region21
  $region20: #{_normalizer_forward_impl.1} parent=0 // pred_region
    _
  $region21: #{_normalizer_forward_impl.1} parent=0 // pred_fallthru
    _
  // Predicated region
  $region22: #{_normalizer_forward_impl.1} parent=0 // pred_check
    _
  $region23: #{_normalizer_forward_impl.1} parent=0 // pred_check_branch
    %105 = sbr.rel (0) target = $region25
  $region24: #{_normalizer_forward_impl.1} parent=0 // pred_region
    _
  $region25: #{_normalizer_forward_impl.1} parent=0 // pred_fallthru
    _
  // Predicated region
  $region26: #{_normalizer_forward_impl.1} parent=0 // pred_check
    _
  $region27: #{_normalizer_forward_impl.1} parent=0 // pred_check_branch
    %107 = sbr.rel (0) target = $region29
  $region28: #{_normalizer_forward_impl.1} parent=0 // pred_region
    _
  $region29: #{_normalizer_forward_impl.1} parent=0 // pred_fallthru
    _
  // Predicated region
  $region30: #{_normalizer_forward_impl.1} parent=0 // pred_check
    _
  $region31: #{_normalizer_forward_impl.1} parent=0 // pred_check_branch
    %109 = sbr.rel (0) target = $region33
  $region32: #{_normalizer_forward_impl.1} parent=0 // pred_region
    _
  $region33: #{_normalizer_forward_impl.1} parent=0 // pred_fallthru
    _
  // Predicated region
  $region34: #{_normalizer_forward_impl.1} parent=0 // pred_check
    _
  $region35: #{_normalizer_forward_impl.1} parent=0 // pred_check_branch
    %111 = sbr.rel (0) target = $region37
  $region36: #{_normalizer_forward_impl.1} parent=0 // pred_region
    _
  $region37: #{_normalizer_forward_impl.1} parent=0 // pred_fallthru
    _
  // Predicated region
  $region38: #{_normalizer_forward_impl.1} parent=0 // pred_check
    _
  $region39: #{_normalizer_forward_impl.1} parent=0 // pred_check_branch
    %113 = sbr.rel (0) target = $region41
  $region40: #{_normalizer_forward_impl.1} parent=0 // pred_region
    _
  $region41: #{_normalizer_forward_impl.1} parent=0 // pred_fallthru
    _
  // Predicated region
  $region42: #{_normalizer_forward_impl.1} parent=0 // pred_check
    _
  $region43: #{_normalizer_forward_impl.1} parent=0 // pred_check_branch
    %115 = sbr.rel (0) target = $region45
  $region44: #{_normalizer_forward_impl.1} parent=0 // pred_region
    _
  $region45: #{_normalizer_forward_impl.1} parent=0 // pred_fallthru
    _
  // Predicated region
  $region46: #{_normalizer_forward_impl.1} parent=0 // pred_check
    _
  $region47: #{_normalizer_forward_impl.1} parent=0 // pred_check_branch
    %117 = sbr.rel (0) target = $region49
  $region48: #{_normalizer_forward_impl.1} parent=0 // pred_region
    _
  $region49: #{_normalizer_forward_impl.1} parent=0 // pred_fallthru
    _
  // Predicated region
  $region50: #{_normalizer_forward_impl.1} parent=0 // pred_check
    _
  $region51: #{_normalizer_forward_impl.1} parent=0 // pred_check_branch
    %119 = sbr.rel (0) target = $region53
  $region52: #{_normalizer_forward_impl.1} parent=0 // pred_region
    _
  $region53: #{_normalizer_forward_impl.1} parent=0 // pred_fallthru
    _
  // Predicated region
  $region54: #{_normalizer_forward_impl.1} parent=0 // pred_check
    _
  $region55: #{_normalizer_forward_impl.1} parent=0 // pred_check_branch
    %121 = sbr.rel (0) target = $region57
  $region56: #{_normalizer_forward_impl.1} parent=0 // pred_region
    _
  $region57: #{_normalizer_forward_impl.1} parent=0 // pred_fallthru
    _

</llo_original>
